<compile_context>
chip_gen: v7x
topology: tpu7x:2x2x1
jax: 0.10.0
libtpu: 0.0.40
codegen_flags: <defaults>
</compile_context>

<pallas_src>
import jax
import jax.numpy as jnp
from jax import lax
from jax.experimental import pallas as pl
from jax.experimental.pallas import tpu as pltpu

LN_EPS = 1e-5  # nn.LayerNorm default
_INV_SQRT2 = 0.7071067811865476


def _attention_pooling_kernel(x_ref, mask_ref, w1_ref, b1_ref, g_ref, beta_ref,
                              w2_ref, b2_ref, out_ref):
    # x_ref: (Bt, S, H) f32 | mask_ref: (1, Bt, S) f32 | w1_ref: (H, H) bf16
    # b1/g/beta/w2: (1, H) f32 | b2_ref: (1, 1) f32 in SMEM | out_ref: (1, Bt, H) f32
    bt, s, hd = x_ref.shape
    x = x_ref[...]                                   # (Bt, S, H) f32 (kept f32 for pooling)
    x2 = x.reshape(bt * s, hd)                       # free: last dim unchanged

    # ---- Linear(H, H): bf16 MXU matmul, f32 accumulation ----
    h = jnp.dot(x2.astype(jnp.bfloat16), w1_ref[...],
                preferred_element_type=jnp.float32)  # (Bt*S, H) f32
    h = h + b1_ref[...]

    # ---- LayerNorm(H), single-pass stats ----
    mean = jnp.mean(h, axis=-1, keepdims=True)
    var = jnp.mean(h * h, axis=-1, keepdims=True) - mean * mean
    hn = (h - mean) * lax.rsqrt(var + LN_EPS)
    hn = hn * g_ref[...] + beta_ref[...]

    # ---- GELU (exact erf, matches torch.nn.GELU default) ----
    hg = 0.5 * hn * (1.0 + lax.erf(hn * jnp.float32(_INV_SQRT2)))

    # ---- Linear(H, 1): per-token score via VPU sum-product (lane reduce) ----
    hg3 = hg.reshape(bt, s, hd)
    scores = jnp.sum(hg3 * w2_ref[...], axis=-1) + b2_ref[0, 0]   # (Bt, S), lane-dense

    # ---- mask + softmax over the sequence axis (lanes) ----
    mask = mask_ref[0]                                            # (Bt, S)
    scores = jnp.where(mask == 0.0, -jnp.inf, scores)
    smax = jnp.max(scores, axis=-1, keepdims=True)                # (Bt, 1)
    e = jnp.exp(scores - smax)
    denom = jnp.sum(e, axis=-1, keepdims=True)
    w = e * pl.reciprocal(denom, approx=False)                    # (Bt, S)

    # ---- weighted sum over sequence, f32 accumulation ----
    out_ref[0] = jnp.sum(w[:, :, None] * x, axis=1)               # (Bt, H)


def _choose_block_b(B, S, H, budget_bytes=4 << 20):
    """Pick Bt (divisor of B): fits a conservative per-step VMEM budget (safe for the
    v7x 64 MiB / 32 MiB-scoped default with double buffering + f32 activations) and,
    when possible, keeps >= 2 grid steps so megacore (v7x: 2 TCs) can split the work."""
    per_row = max(S * H * 4, 1)                  # one f32 (S, H) activation slab per row
    cap = max(1, min(B, budget_bytes // per_row))
    if B >= 2:
        cap = min(cap, max(1, B // 2))
    bt = cap
    while B % bt != 0:
        bt -= 1
    return bt


def attention_pooling(x, attention_mask, params, block_b=None):
    """x: (B, S, H) float32, attention_mask: (B, S) (0/1). Returns (B, H) float32."""
    B, S, H = x.shape
    w1, b1, gamma, beta, w2, b2 = params
    if block_b is None:
        block_b = _choose_block_b(B, S, H)
    assert B % block_b == 0
    nb = B // block_b

    w1_bf16 = w1.astype(jnp.bfloat16)                                  # halve W1 HBM/VMEM traffic
    mask = attention_mask.astype(jnp.float32).reshape(nb, block_b, S)  # lane-dense (Bt, S) tiles

    out = pl.pallas_call(
        _attention_pooling_kernel,
        out_shape=jax.ShapeDtypeStruct((nb, block_b, H), jnp.float32),
        grid=(nb,),
        in_specs=[
            pl.BlockSpec((block_b, S, H), lambda i: (i, 0, 0)),        # x
            pl.BlockSpec((1, block_b, S), lambda i: (i, 0, 0)),        # mask
            pl.BlockSpec((H, H), lambda i: (0, 0)),                    # W1 (in_dim x out_dim, bf16)
            pl.BlockSpec((1, H), lambda i: (0, 0)),                    # b1
            pl.BlockSpec((1, H), lambda i: (0, 0)),                    # LayerNorm gamma
            pl.BlockSpec((1, H), lambda i: (0, 0)),                    # LayerNorm beta
            pl.BlockSpec((1, H), lambda i: (0, 0)),                    # W2 (row vector)
            pl.BlockSpec(memory_space=pltpu.MemorySpace.SMEM),         # b2 scalar -> SMEM
        ],
        out_specs=pl.BlockSpec((1, block_b, H), lambda i: (i, 0, 0)),  # lane/sublane-dense slab
        compiler_params=pltpu.CompilerParams(dimension_semantics=("parallel",)),
    )(x, mask, w1_bf16, b1, gamma, beta, w2, b2)
    return out.reshape(B, H)


def init_params(key, in_dim):
    """Deterministic parameter init mirroring the module's shapes."""
    k1, k2, k3, k4 = jax.random.split(key, 4)
    scale = 1.0 / jnp.sqrt(jnp.float32(in_dim))
    w1 = jax.random.uniform(k1, (in_dim, in_dim), jnp.float32, -scale, scale)  # x @ w1
    b1 = jax.random.uniform(k2, (1, in_dim), jnp.float32, -scale, scale)
    gamma = jnp.ones((1, in_dim), jnp.float32)
    beta = jnp.zeros((1, in_dim), jnp.float32)
    w2 = jax.random.uniform(k3, (1, in_dim), jnp.float32, -scale, scale)       # Linear(H,1) weight
    b2 = jax.random.uniform(k4, (1, 1), jnp.float32, -scale, scale)
    return (w1, b1, gamma, beta, w2, b2)


def reference(x, attention_mask, params, matmul_dtype=jnp.bfloat16):
    """Plain-JAX reference matching the PyTorch forward. matmul_dtype=bfloat16 mirrors
    the kernel's MXU precision; float32 gives the exact PyTorch-f32 numerics."""
    w1, b1, gamma, beta, w2, b2 = params
    B, S, H = x.shape
    h = jnp.dot(x.reshape(B * S, H).astype(matmul_dtype), w1.astype(matmul_dtype),
                preferred_element_type=jnp.float32).reshape(B, S, H) + b1
    mean = jnp.mean(h, axis=-1, keepdims=True)
    var = jnp.mean(h * h, axis=-1, keepdims=True) - mean * mean
    hn = (h - mean) * lax.rsqrt(var + LN_EPS) * gamma + beta
    hg = 0.5 * hn * (1.0 + lax.erf(hn * jnp.float32(_INV_SQRT2)))
    w = jnp.sum(hg * w2, axis=-1, keepdims=True) + b2[0, 0]          # (B, S, 1)
    w = jnp.where(attention_mask[..., None] == 0, -jnp.inf, w)
    w = jax.nn.softmax(w, axis=1)
    return jnp.sum(w * x, axis=1)                                    # (B, H)


if __name__ == "__main__":
    B, S, H = 2, 8, 32
    key = jax.random.PRNGKey(0)
    kx, kp = jax.random.split(key)

    x = jax.random.normal(kx, (B, S, H), jnp.float32)
    # deterministic mask: first sequence fully valid, second has trailing padding
    attention_mask = jnp.array(
        [[1] * S, [1] * (S // 2) + [0] * (S - S // 2)], dtype=jnp.int32)

    params = init_params(kp, H)

    out = attention_pooling(x, attention_mask, params)
    out = jax.block_until_ready(out)
    assert out.shape == (B, H)

    # Strict check against a reference using the same bf16-matmul / f32-elsewhere numerics.
    ref_bf16 = reference(x, attention_mask, params, matmul_dtype=jnp.bfloat16)
    assert jnp.allclose(out, ref_bf16, atol=1e-4, rtol=1e-4), (out, ref_bf16)

    # Loose sanity check against the exact f32 PyTorch-equivalent forward
    # (difference comes solely from the bf16 MXU matmul optimization).
    ref_f32 = reference(x, attention_mask, params, matmul_dtype=jnp.float32)
    assert jnp.allclose(out, ref_f32, atol=5e-2, rtol=5e-2), (out, ref_f32)

    print("KERNEL_OK")
</pallas_src>

<mosaic_0001>
module attributes {stable_mosaic.version = 11 : i64} {
  func.func @_attention_pooling_kernel(%arg0: i32, %arg1: memref<1x8x32xf32, #tpu.memory_space<vmem>>, %arg2: memref<1x1x8xf32, #tpu.memory_space<vmem>>, %arg3: memref<32x32xbf16, #tpu.memory_space<vmem>>, %arg4: memref<1x32xf32, #tpu.memory_space<vmem>>, %arg5: memref<1x32xf32, #tpu.memory_space<vmem>>, %arg6: memref<1x32xf32, #tpu.memory_space<vmem>>, %arg7: memref<1x32xf32, #tpu.memory_space<vmem>>, %arg8: memref<1x1xf32, #tpu.memory_space<smem>>, %arg9: memref<1x1x32xf32, #tpu.memory_space<vmem>>) attributes {dimension_semantics = [#tpu.dimension_semantics<parallel>], iteration_bounds = array<i64: 2>, scalar_prefetch = 0 : i64, scratch_operands = 0 : i64, tpu.core_type = #tpu.core_type<tc>, window_params = [{transform_indices = @transform_0, window_bounds = array<i64: 1, 8, 32>}, {transform_indices = @transform_1, window_bounds = array<i64: 1, 1, 8>}, {pipeline_mode = #tpu.pipeline_mode<synchronous>, transform_indices = @transform_2, window_bounds = array<i64: 32, 32>}, {pipeline_mode = #tpu.pipeline_mode<synchronous>, transform_indices = @transform_3, window_bounds = array<i64: 1, 32>}, {pipeline_mode = #tpu.pipeline_mode<synchronous>, transform_indices = @transform_4, window_bounds = array<i64: 1, 32>}, {pipeline_mode = #tpu.pipeline_mode<synchronous>, transform_indices = @transform_5, window_bounds = array<i64: 1, 32>}, {pipeline_mode = #tpu.pipeline_mode<synchronous>, transform_indices = @transform_6, window_bounds = array<i64: 1, 32>}, {transform_indices = @transform_7, window_bounds = array<i64: 1, 1>}, {transform_indices = @transform_8, window_bounds = array<i64: 1, 1, 32>}]} {
    %c0 = arith.constant 0 : index
    %c0_0 = arith.constant 0 : index
    %c0_1 = arith.constant 0 : index
    %0 = vector.load %arg1[%c0, %c0_0, %c0_1] : memref<1x8x32xf32, #tpu.memory_space<vmem>>, vector<1x8x32xf32>
    %1 = vector.shape_cast %0 : vector<1x8x32xf32> to vector<8x32xf32>
    %2 = arith.truncf %1 : vector<8x32xf32> to vector<8x32xbf16>
    %c0_2 = arith.constant 0 : index
    %c0_3 = arith.constant 0 : index
    %3 = vector.load %arg3[%c0_2, %c0_3] : memref<32x32xbf16, #tpu.memory_space<vmem>>, vector<32x32xbf16>
    %cst = arith.constant dense<0.000000e+00> : vector<8x32xf32>
    %4 = tpu.matmul %2, %3, %cst {dimension_numbers = #tpu.dot_dimension_numbers<[1], [0], [0], [1], [0, 0, 1, 1], [], []>} : vector<8x32xbf16>, vector<32x32xbf16>, vector<8x32xf32> -> vector<8x32xf32>
    %c0_4 = arith.constant 0 : index
    %c0_5 = arith.constant 0 : index
    %5 = vector.load %arg4[%c0_4, %c0_5] : memref<1x32xf32, #tpu.memory_space<vmem>>, vector<1x32xf32>
    %6 = vector.broadcast %5 : vector<1x32xf32> to vector<8x32xf32>
    %7 = arith.addf %4, %6 : vector<8x32xf32>
    %cst_6 = arith.constant dense<0.000000e+00> : vector<8xf32>
    %8 = vector.multi_reduction <add>, %7, %cst_6 [1] : vector<8x32xf32> to vector<8xf32>
    %9 = vector.shape_cast %8 : vector<8xf32> to vector<8x1xf32>
    %cst_7 = arith.constant 3.200000e+01 : f32
    %10 = vector.broadcast %cst_7 : f32 to vector<8x1xf32>
    %11 = arith.divf %9, %10 : vector<8x1xf32>
    %12 = arith.mulf %7, %7 : vector<8x32xf32>
    %cst_8 = arith.constant dense<0.000000e+00> : vector<8xf32>
    %13 = vector.multi_reduction <add>, %12, %cst_8 [1] : vector<8x32xf32> to vector<8xf32>
    %14 = vector.shape_cast %13 : vector<8xf32> to vector<8x1xf32>
    %cst_9 = arith.constant 3.200000e+01 : f32
    %15 = vector.broadcast %cst_9 : f32 to vector<8x1xf32>
    %16 = arith.divf %14, %15 : vector<8x1xf32>
    %17 = arith.mulf %11, %11 : vector<8x1xf32>
    %18 = arith.subf %16, %17 : vector<8x1xf32>
    %19 = vector.broadcast %11 : vector<8x1xf32> to vector<8x32xf32>
    %20 = arith.subf %7, %19 : vector<8x32xf32>
    %cst_10 = arith.constant 9.99999974E-6 : f32
    %21 = vector.broadcast %cst_10 : f32 to vector<8x1xf32>
    %22 = arith.addf %18, %21 : vector<8x1xf32>
    %23 = math.rsqrt %22 : vector<8x1xf32>
    %24 = vector.broadcast %23 : vector<8x1xf32> to vector<8x32xf32>
    %25 = arith.mulf %20, %24 : vector<8x32xf32>
    %c0_11 = arith.constant 0 : index
    %c0_12 = arith.constant 0 : index
    %26 = vector.load %arg5[%c0_11, %c0_12] : memref<1x32xf32, #tpu.memory_space<vmem>>, vector<1x32xf32>
    %27 = vector.broadcast %26 : vector<1x32xf32> to vector<8x32xf32>
    %28 = arith.mulf %25, %27 : vector<8x32xf32>
    %c0_13 = arith.constant 0 : index
    %c0_14 = arith.constant 0 : index
    %29 = vector.load %arg6[%c0_13, %c0_14] : memref<1x32xf32, #tpu.memory_space<vmem>>, vector<1x32xf32>
    %30 = vector.broadcast %29 : vector<1x32xf32> to vector<8x32xf32>
    %31 = arith.addf %28, %30 : vector<8x32xf32>
    %cst_15 = arith.constant 5.000000e-01 : f32
    %32 = vector.broadcast %cst_15 : f32 to vector<8x32xf32>
    %33 = arith.mulf %32, %31 : vector<8x32xf32>
    %cst_16 = arith.constant 0.707106769 : f32
    %34 = vector.broadcast %cst_16 : f32 to vector<8x32xf32>
    %35 = arith.mulf %31, %34 : vector<8x32xf32>
    %36 = math.erf %35 : vector<8x32xf32>
    %cst_17 = arith.constant 1.000000e+00 : f32
    %37 = vector.broadcast %cst_17 : f32 to vector<8x32xf32>
    %38 = arith.addf %37, %36 : vector<8x32xf32>
    %39 = arith.mulf %33, %38 : vector<8x32xf32>
    %40 = vector.shape_cast %39 : vector<8x32xf32> to vector<1x8x32xf32>
    %c0_18 = arith.constant 0 : index
    %c0_19 = arith.constant 0 : index
    %41 = vector.load %arg7[%c0_18, %c0_19] : memref<1x32xf32, #tpu.memory_space<vmem>>, vector<1x32xf32>
    %42 = vector.shape_cast %41 : vector<1x32xf32> to vector<1x1x32xf32>
    %43 = vector.broadcast %42 : vector<1x1x32xf32> to vector<1x8x32xf32>
    %44 = arith.mulf %40, %43 : vector<1x8x32xf32>
    %cst_20 = arith.constant dense<0.000000e+00> : vector<1x8xf32>
    %45 = vector.multi_reduction <add>, %44, %cst_20 [2] : vector<1x8x32xf32> to vector<1x8xf32>
    %c0_21 = arith.constant 0 : index
    %c0_22 = arith.constant 0 : index
    %46 = memref.load %arg8[%c0_21, %c0_22] : memref<1x1xf32, #tpu.memory_space<smem>>
    %47 = vector.broadcast %46 : f32 to vector<1x8xf32>
    %48 = arith.addf %45, %47 : vector<1x8xf32>
    %c0_23 = arith.constant 0 : index
    %c0_24 = arith.constant 0 : index
    %c0_25 = arith.constant 0 : index
    %49 = vector.load %arg2[%c0_23, %c0_24, %c0_25] : memref<1x1x8xf32, #tpu.memory_space<vmem>>, vector<1x1x8xf32>
    %50 = vector.shape_cast %49 : vector<1x1x8xf32> to vector<1x8xf32>
    %cst_26 = arith.constant 0.000000e+00 : f32
    %51 = vector.broadcast %cst_26 : f32 to vector<1x8xf32>
    %52 = arith.cmpf oeq, %50, %51 : vector<1x8xf32>
    %cst_27 = arith.constant 0xFF800000 : f32
    %53 = vector.broadcast %cst_27 : f32 to vector<1x8xf32>
    %54 = arith.select %52, %53, %48 : vector<1x8xi1>, vector<1x8xf32>
    %cst_28 = arith.constant dense<0xFF800000> : vector<1xf32>
    %55 = vector.multi_reduction <maximumf>, %54, %cst_28 [1] : vector<1x8xf32> to vector<1xf32>
    %56 = vector.shape_cast %55 : vector<1xf32> to vector<1x1xf32>
    %57 = vector.broadcast %56 : vector<1x1xf32> to vector<1x8xf32>
    %58 = arith.subf %54, %57 : vector<1x8xf32>
    %59 = math.exp %58 : vector<1x8xf32>
    %cst_29 = arith.constant dense<0.000000e+00> : vector<1xf32>
    %60 = vector.multi_reduction <add>, %59, %cst_29 [1] : vector<1x8xf32> to vector<1xf32>
    %61 = vector.shape_cast %60 : vector<1xf32> to vector<1x1xf32>
    %62 = tpu.reciprocal %61 : vector<1x1xf32> -> vector<1x1xf32>
    %63 = vector.broadcast %62 : vector<1x1xf32> to vector<1x8xf32>
    %64 = arith.mulf %59, %63 : vector<1x8xf32>
    %65 = vector.shape_cast %64 : vector<1x8xf32> to vector<1x8x1xf32>
    %66 = vector.broadcast %65 : vector<1x8x1xf32> to vector<1x8x32xf32>
    %67 = arith.mulf %66, %0 : vector<1x8x32xf32>
    %cst_30 = arith.constant dense<0.000000e+00> : vector<1x32xf32>
    %68 = vector.multi_reduction <add>, %67, %cst_30 [1] : vector<1x8x32xf32> to vector<1x32xf32>
    %c0_31 = arith.constant 0 : index
    %c0_32 = arith.constant 0 : index
    %c0_33 = arith.constant 0 : index
    %69 = vector.load %arg9[%c0_31, %c0_32, %c0_33] : memref<1x1x32xf32, #tpu.memory_space<vmem>>, vector<1x1x32xf32>
    %70 = vector.shape_cast %69 : vector<1x1x32xf32> to vector<1x32xf32>
    %71 = vector.shape_cast %68 : vector<1x32xf32> to vector<1x1x32xf32>
    tpu.vector_store %arg9[%c0_31, %c0_32, %c0_33], %71 {strides = array<i32>} : memref<1x1x32xf32, #tpu.memory_space<vmem>>, vector<1x1x32xf32>,
    return
  }
  func.func @transform_0(%arg0: i32) -> (i32, i32, i32) {
    %c0_i32 = arith.constant 0 : i32
    %c0_i32_0 = arith.constant 0 : i32
    %c0_i32_1 = arith.constant 0 : i32
    return %arg0, %c0_i32, %c0_i32_0 : i32, i32, i32
  }
  func.func @transform_1(%arg0: i32) -> (i32, i32, i32) {
    %c0_i32 = arith.constant 0 : i32
    %c0_i32_0 = arith.constant 0 : i32
    %c0_i32_1 = arith.constant 0 : i32
    return %arg0, %c0_i32, %c0_i32_0 : i32, i32, i32
  }
  func.func @transform_2(%arg0: i32) -> (i32, i32) {
    %c0_i32 = arith.constant 0 : i32
    %c0_i32_0 = arith.constant 0 : i32
    %c0_i32_1 = arith.constant 0 : i32
    return %c0_i32, %c0_i32_0 : i32, i32
  }
  func.func @transform_3(%arg0: i32) -> (i32, i32) {
    %c0_i32 = arith.constant 0 : i32
    %c0_i32_0 = arith.constant 0 : i32
    %c0_i32_1 = arith.constant 0 : i32
    return %c0_i32, %c0_i32_0 : i32, i32
  }
  func.func @transform_4(%arg0: i32) -> (i32, i32) {
    %c0_i32 = arith.constant 0 : i32
    %c0_i32_0 = arith.constant 0 : i32
    %c0_i32_1 = arith.constant 0 : i32
    return %c0_i32, %c0_i32_0 : i32, i32
  }
  func.func @transform_5(%arg0: i32) -> (i32, i32) {
    %c0_i32 = arith.constant 0 : i32
    %c0_i32_0 = arith.constant 0 : i32
    %c0_i32_1 = arith.constant 0 : i32
    return %c0_i32, %c0_i32_0 : i32, i32
  }
  func.func @transform_6(%arg0: i32) -> (i32, i32) {
    %c0_i32 = arith.constant 0 : i32
    %c0_i32_0 = arith.constant 0 : i32
    %c0_i32_1 = arith.constant 0 : i32
    return %c0_i32, %c0_i32_0 : i32, i32
  }
  func.func @transform_7(%arg0: i32) -> (i32, i32) {
    %c0_i32 = arith.constant 0 : i32
    %c0_i32_0 = arith.constant 0 : i32
    %c0_i32_1 = arith.constant 0 : i32
    return %c0_i32, %c0_i32_0 : i32, i32
  }
  func.func @transform_8(%arg0: i32) -> (i32, i32, i32) {
    %c0_i32 = arith.constant 0 : i32
    %c0_i32_0 = arith.constant 0 : i32
    %c0_i32_1 = arith.constant 0 : i32
    return %arg0, %c0_i32, %c0_i32_0 : i32, i32, i32
  }
}

</mosaic_0001>

<llo_original>
// kernel: tpu_custom_call.1
$region0: #{tpu_custom_call.1}
  #allocation0 [shape = 'u32[]', space=smem, size = 0x4, offset = 0x4, fixed_abs, tag = 'smem constant byte address 0x4 - core index']
  #allocation1 [shape = 'u32[144,128]{1,0:T(1,128)}', space=vmem, size = 0x12000, scoped, tag = 'internal scratch']
  #allocation2 [shape = 'f32[1,1]{1,0:T(1,128)S(6)}', space=smem, size = 0x200, scoped, tag = 'scoped memory for tpu_custom_call.1']
  %s0 = inlined_call_operand.hbm [shape: f32[2,8,32], index: 0, kind: input, shape index: {}]
  %s1 = inlined_call_operand.vmem [shape: f32[2,1,8], index: 1, kind: input, shape index: {}]
  %s2 = inlined_call_operand.hbm [shape: bf16[32,32], index: 2, kind: input, shape index: {}]
  %s3 = inlined_call_operand.vmem [shape: f32[1,32], index: 3, kind: input, shape index: {}]
  %s4 = inlined_call_operand.vmem [shape: f32[1,32], index: 4, kind: input, shape index: {}]
  %s5 = inlined_call_operand.vmem [shape: f32[1,32], index: 5, kind: input, shape index: {}]
  %s6 = inlined_call_operand.vmem [shape: f32[1,32], index: 6, kind: input, shape index: {}]
  %s7 = inlined_call_operand.<no memory space> [shape: f32[1,1], index: 7, kind: input, shape index: {}]
  %s8 = inlined_call_operand.hbm [shape: f32[2,1,32], index: 8, kind: output, shape index: {}]
  %s9 = sld [smem:[#allocation0]]
  $region73: #{tpu_custom_call.1} parent=0
    _
  %s11 = ssub.s32 1, %s9
  %s12 = scalar_select 0, %s11, %s9
  %13 = sst [smem:[#allocation2]] %s7
  $region1: #{tpu_custom_call.1} parent=0
    #allocation3 [shape = 'u8[8192]{0}', space=vmem, size = 0x2000, scoped, tag = 'input window, operand 0']
    #allocation4 [shape = 's32[2]{0}', space=sflag, size = 0x8, scoped, tag = 'scoped memory for tpu_custom_call.1']
    #allocation5 [shape = 's32[2]{0}', space=sflag, size = 0x8, scoped, tag = 'scoped memory for tpu_custom_call.1']
    #allocation6 [shape = 'u8[8192]{0}', space=vmem, size = 0x2000, scoped, tag = 'input window, operand 2, single buffered']
    #allocation7 [shape = 's32[1]{0}', space=sflag, size = 0x4, scoped, tag = 'scoped memory for tpu_custom_call.1']
    #allocation8 [shape = 'u8[1024]{0}', space=vmem, size = 0x400, scoped, tag = 'output window, operand 0']
    %14 = vsyncpa [#allocation4], 0
    %s15 = scalar_lea.sflag [#allocation4], 1
    %16 = vsyncpa %s15, 0
    %17 = vsyncpa [#allocation7], 0
    %18 = vsyncpa [#allocation5], 0
    %s19 = scalar_lea.sflag [#allocation5], 1
    %20 = vsyncpa %s19, 0
    loop: start=0, step=1, limit=4
    $region2: #{tpu_custom_call.1} parent=1 // loop_pre_header
      _
    $region3: #{tpu_custom_call.1} parent=1 // loop_header
      %s22 = sphi 0, %s26
      %p23 = scmp.ge.s32.totalorder %s22, 4
      %s32 = sphi 0, %s34
      %s35 = sphi 0, %s32
      %s36 = sphi 0, %s35
      %s52 = sphi 0, %s36
      %s58 = sphi 0, %s60
      %s61 = sphi 0, %s58
      %s62 = sphi 0, %s61
      %s78 = sphi 0, %s62
      %s82 = sphi 0, %s82
      %s84 = sphi 0, %s82
      %s85 = sphi 0, %s84
      %s99 = sphi 0, %s85
      %s103 = sphi 0, %s103
      %s105 = sphi 0, %s103
      %s106 = sphi 0, %s105
      %s120 = sphi 0, %s106
      %s124 = sphi 0, %s124
      %s126 = sphi 0, %s124
      %s127 = sphi 0, %s126
      %s141 = sphi 0, %s127
      %s145 = sphi 0, %s145
      %s147 = sphi 0, %s145
      %s148 = sphi 0, %s147
      %s162 = sphi 0, %s148
      %s166 = sphi 0, %s166
      %s168 = sphi 0, %s166
      %s169 = sphi 0, %s168
      %s183 = sphi 0, %s169
      %s187 = sphi 0, %s187
      %s189 = sphi 0, %s187
      %s190 = sphi 0, %s189
      %s204 = sphi 0, %s190
      %s210 = sphi 0, %s212
      %s213 = sphi 0, %s210
      %s214 = sphi 0, %s213
      %s230 = sphi 0, %s214
    $region4: #{tpu_custom_call.1} parent=1 // loop_header_branch
      %25 = sbr.rel (%p23) target = $region8
    $region5: #{tpu_custom_call.1} parent=1 // loop_body
      %s27 = ssub.s32 %s22, 1
      %s28 = ssub.s32 %s22, 2
      %s29 = sadd.s32 %s22, 1
      %s30 = ssub.s32 %s22, %s29
      %p31 = scmp.eq.s32.totalorder %s30, 0
      %s33 = sadd.s32 %s32, 1
      %s34 = scalar_select %p31, %s32, %s33
      %p37 = pneg %p31
      %p38 = scmp.eq.s32.totalorder %s22, 1
      %p39 = por %p37, %p38
      %p40 = scmp.ne.s32.totalorder %s32, %s35
      %p41 = scmp.eq.s32.totalorder %s22, 0
      %p42 = por %p40, %p41
      %p43 = scmp.ne.s32.totalorder %s32, %s35
      %p44 = scmp.eq.s32.totalorder %s27, 1
      %p45 = por %p43, %p44
      %p46 = scmp.ne.s32.totalorder %s35, %s36
      %p47 = scmp.eq.s32.totalorder %s27, 0
      %p48 = por %p46, %p47
      %p49 = scmp.ne.s32.totalorder %s35, %s36
      %p50 = scmp.eq.s32.totalorder %s28, 1
      %p51 = por %p49, %p50
      %p53 = scmp.ne.s32.totalorder %s36, %s52
      %p54 = scmp.eq.s32.totalorder %s28, 0
      %p55 = por %p53, %p54
      %s56 = ssub.s32 %s22, %s29
      %p57 = scmp.eq.s32.totalorder %s56, 0
      %s59 = sadd.s32 %s58, 1
      %s60 = scalar_select %p57, %s58, %s59
      %p63 = pneg %p57
      %p64 = scmp.eq.s32.totalorder %s22, 1
      %p65 = por %p63, %p64
      %p66 = scmp.ne.s32.totalorder %s58, %s61
      %p67 = scmp.eq.s32.totalorder %s22, 0
      %p68 = por %p66, %p67
      %p69 = scmp.ne.s32.totalorder %s58, %s61
      %p70 = scmp.eq.s32.totalorder %s27, 1
      %p71 = por %p69, %p70
      %p72 = scmp.ne.s32.totalorder %s61, %s62
      %p73 = scmp.eq.s32.totalorder %s27, 0
      %p74 = por %p72, %p73
      %p75 = scmp.ne.s32.totalorder %s61, %s62
      %p76 = scmp.eq.s32.totalorder %s28, 1
      %p77 = por %p75, %p76
      %p79 = scmp.ne.s32.totalorder %s62, %s78
      %p80 = scmp.eq.s32.totalorder %s28, 0
      %p81 = por %p79, %p80
      %s83 = sadd.s32 %s82, 1
      %p86 = scmp.eq.s32.totalorder %s22, 1
      %p87 = scmp.ne.s32.totalorder %s82, %s84
      %p88 = scmp.eq.s32.totalorder %s22, 0
      %p89 = por %p87, %p88
      %p90 = scmp.ne.s32.totalorder %s82, %s84
      %p91 = scmp.eq.s32.totalorder %s27, 1
      %p92 = por %p90, %p91
      %p93 = scmp.ne.s32.totalorder %s84, %s85
      %p94 = scmp.eq.s32.totalorder %s27, 0
      %p95 = por %p93, %p94
      %p96 = scmp.ne.s32.totalorder %s84, %s85
      %p97 = scmp.eq.s32.totalorder %s28, 1
      %p98 = por %p96, %p97
      %p100 = scmp.ne.s32.totalorder %s85, %s99
      %p101 = scmp.eq.s32.totalorder %s28, 0
      %p102 = por %p100, %p101
      %s104 = sadd.s32 %s103, 1
      %p107 = scmp.eq.s32.totalorder %s22, 1
      %p108 = scmp.ne.s32.totalorder %s103, %s105
      %p109 = scmp.eq.s32.totalorder %s22, 0
      %p110 = por %p108, %p109
      %p111 = scmp.ne.s32.totalorder %s103, %s105
      %p112 = scmp.eq.s32.totalorder %s27, 1
      %p113 = por %p111, %p112
      %p114 = scmp.ne.s32.totalorder %s105, %s106
      %p115 = scmp.eq.s32.totalorder %s27, 0
      %p116 = por %p114, %p115
      %p117 = scmp.ne.s32.totalorder %s105, %s106
      %p118 = scmp.eq.s32.totalorder %s28, 1
      %p119 = por %p117, %p118
      %p121 = scmp.ne.s32.totalorder %s106, %s120
      %p122 = scmp.eq.s32.totalorder %s28, 0
      %p123 = por %p121, %p122
      %s125 = sadd.s32 %s124, 1
      %p128 = scmp.eq.s32.totalorder %s22, 1
      %p129 = scmp.ne.s32.totalorder %s124, %s126
      %p130 = scmp.eq.s32.totalorder %s22, 0
      %p131 = por %p129, %p130
      %p132 = scmp.ne.s32.totalorder %s124, %s126
      %p133 = scmp.eq.s32.totalorder %s27, 1
      %p134 = por %p132, %p133
      %p135 = scmp.ne.s32.totalorder %s126, %s127
      %p136 = scmp.eq.s32.totalorder %s27, 0
      %p137 = por %p135, %p136
      %p138 = scmp.ne.s32.totalorder %s126, %s127
      %p139 = scmp.eq.s32.totalorder %s28, 1
      %p140 = por %p138, %p139
      %p142 = scmp.ne.s32.totalorder %s127, %s141
      %p143 = scmp.eq.s32.totalorder %s28, 0
      %p144 = por %p142, %p143
      %s146 = sadd.s32 %s145, 1
      %p149 = scmp.eq.s32.totalorder %s22, 1
      %p150 = scmp.ne.s32.totalorder %s145, %s147
      %p151 = scmp.eq.s32.totalorder %s22, 0
      %p152 = por %p150, %p151
      %p153 = scmp.ne.s32.totalorder %s145, %s147
      %p154 = scmp.eq.s32.totalorder %s27, 1
      %p155 = por %p153, %p154
      %p156 = scmp.ne.s32.totalorder %s147, %s148
      %p157 = scmp.eq.s32.totalorder %s27, 0
      %p158 = por %p156, %p157
      %p159 = scmp.ne.s32.totalorder %s147, %s148
      %p160 = scmp.eq.s32.totalorder %s28, 1
      %p161 = por %p159, %p160
      %p163 = scmp.ne.s32.totalorder %s148, %s162
      %p164 = scmp.eq.s32.totalorder %s28, 0
      %p165 = por %p163, %p164
      %s167 = sadd.s32 %s166, 1
      %p170 = scmp.eq.s32.totalorder %s22, 1
      %p171 = scmp.ne.s32.totalorder %s166, %s168
      %p172 = scmp.eq.s32.totalorder %s22, 0
      %p173 = por %p171, %p172
      %p174 = scmp.ne.s32.totalorder %s166, %s168
      %p175 = scmp.eq.s32.totalorder %s27, 1
      %p176 = por %p174, %p175
      %p177 = scmp.ne.s32.totalorder %s168, %s169
      %p178 = scmp.eq.s32.totalorder %s27, 0
      %p179 = por %p177, %p178
      %p180 = scmp.ne.s32.totalorder %s168, %s169
      %p181 = scmp.eq.s32.totalorder %s28, 1
      %p182 = por %p180, %p181
      %p184 = scmp.ne.s32.totalorder %s169, %s183
      %p185 = scmp.eq.s32.totalorder %s28, 0
      %p186 = por %p184, %p185
      %s188 = sadd.s32 %s187, 1
      %p191 = scmp.eq.s32.totalorder %s22, 1
      %p192 = scmp.ne.s32.totalorder %s187, %s189
      %p193 = scmp.eq.s32.totalorder %s22, 0
      %p194 = por %p192, %p193
      %p195 = scmp.ne.s32.totalorder %s187, %s189
      %p196 = scmp.eq.s32.totalorder %s27, 1
      %p197 = por %p195, %p196
      %p198 = scmp.ne.s32.totalorder %s189, %s190
      %p199 = scmp.eq.s32.totalorder %s27, 0
      %p200 = por %p198, %p199
      %p201 = scmp.ne.s32.totalorder %s189, %s190
      %p202 = scmp.eq.s32.totalorder %s28, 1
      %p203 = por %p201, %p202
      %p205 = scmp.ne.s32.totalorder %s190, %s204
      %p206 = scmp.eq.s32.totalorder %s28, 0
      %p207 = por %p205, %p206
      %s208 = ssub.s32 %s22, %s29
      %p209 = scmp.eq.s32.totalorder %s208, 0
      %s211 = sadd.s32 %s210, 1
      %s212 = scalar_select %p209, %s210, %s211
      %p215 = pneg %p209
      %p216 = scmp.eq.s32.totalorder %s22, 1
      %p217 = por %p215, %p216
      %p218 = scmp.ne.s32.totalorder %s210, %s213
      %p219 = scmp.eq.s32.totalorder %s22, 0
      %p220 = por %p218, %p219
      %p221 = scmp.ne.s32.totalorder %s210, %s213
      %p222 = scmp.eq.s32.totalorder %s27, 1
      %p223 = por %p221, %p222
      %p224 = scmp.ne.s32.totalorder %s213, %s214
      %p225 = scmp.eq.s32.totalorder %s27, 0
      %p226 = por %p224, %p225
      %p227 = scmp.ne.s32.totalorder %s213, %s214
      %p228 = scmp.eq.s32.totalorder %s28, 1
      %p229 = por %p227, %p228
      %p231 = scmp.ne.s32.totalorder %s214, %s230
      %p232 = scmp.eq.s32.totalorder %s28, 0
      %p233 = por %p231, %p232
      %p234 = scmp.le.s32.totalorder 1, %s22
      %p235 = scmp.lt.s32.totalorder %s22, 3
      %p236 = pnand %p234, %p235
      %p237 = pneg %p236
      // Predicated region
      $region9: #{tpu_custom_call.1} parent=5 // pred_check
        _
      $region10: #{tpu_custom_call.1} parent=5 // pred_check_branch
        %239 = sbr.rel (%p236) target = $region12
      $region11: #{tpu_custom_call.1} parent=5 // pred_region
        %s240 = ssub.s32 %s22, 1
        // Predicated region
        $region13: #{tpu_custom_call.1} parent=11 // pred_check
          %p241 = pneg %p95
        $region14: #{tpu_custom_call.1} parent=11 // pred_check_branch
          %243 = sbr.rel (%p241) target = $region16
        $region15: #{tpu_custom_call.1} parent=11 // pred_region
          %s245 = ssub.s32 256, 256
          %246 = vsyncadd [#allocation7], %s245
          %s247 = sshll.u32 [#allocation6], 4
          %s248 = int_to_ptr.vmem [resolvable:$true] %s247
          %253 = dma.hbm_to_vmem [thread:$0]  %s2, 256, %s248, [#allocation7], 64, 64, 4
        $region16: #{tpu_custom_call.1} parent=11 // pred_fallthru
          _
        // Predicated region
        $region17: #{tpu_custom_call.1} parent=11 // pred_check
          %p254 = pneg %p116
        $region18: #{tpu_custom_call.1} parent=11 // pred_check_branch
          %256 = sbr.rel (%p254) target = $region20
        $region19: #{tpu_custom_call.1} parent=11 // pred_region
          _
        $region20: #{tpu_custom_call.1} parent=11 // pred_fallthru
          _
        // Predicated region
        $region21: #{tpu_custom_call.1} parent=11 // pred_check
          %p257 = pneg %p137
        $region22: #{tpu_custom_call.1} parent=11 // pred_check_branch
          %259 = sbr.rel (%p257) target = $region24
        $region23: #{tpu_custom_call.1} parent=11 // pred_region
          _
        $region24: #{tpu_custom_call.1} parent=11 // pred_fallthru
          _
        // Predicated region
        $region25: #{tpu_custom_call.1} parent=11 // pred_check
          %p260 = pneg %p158
        $region26: #{tpu_custom_call.1} parent=11 // pred_check_branch
          %262 = sbr.rel (%p260) target = $region28
        $region27: #{tpu_custom_call.1} parent=11 // pred_region
          _
        $region28: #{tpu_custom_call.1} parent=11 // pred_fallthru
          _
        // Predicated region
        $region29: #{tpu_custom_call.1} parent=11 // pred_check
          %p263 = pneg %p179
        $region30: #{tpu_custom_call.1} parent=11 // pred_check_branch
          %265 = sbr.rel (%p263) target = $region32
        $region31: #{tpu_custom_call.1} parent=11 // pred_region
          _
        $region32: #{tpu_custom_call.1} parent=11 // pred_fallthru
          _
        // Predicated region
        $region33: #{tpu_custom_call.1} parent=11 // pred_check
          %p266 = pneg %p200
        $region34: #{tpu_custom_call.1} parent=11 // pred_check_branch
          %268 = sbr.rel (%p266) target = $region36
        $region35: #{tpu_custom_call.1} parent=11 // pred_region
          _
        $region36: #{tpu_custom_call.1} parent=11 // pred_fallthru
          _
      $region12: #{tpu_custom_call.1} parent=5 // pred_fallthru
        _
      %p269 = scmp.lt.s32.totalorder %s22, 2
      // Predicated region
      $region37: #{tpu_custom_call.1} parent=5 // pred_check
        %p270 = pneg %p269
      $region38: #{tpu_custom_call.1} parent=5 // pred_check_branch
        %272 = sbr.rel (%p270) target = $region40
      $region39: #{tpu_custom_call.1} parent=5 // pred_region
        // Predicated region
        $region41: #{tpu_custom_call.1} parent=39 // pred_check
          %p273 = pneg %p42
        $region42: #{tpu_custom_call.1} parent=39 // pred_check_branch
          %275 = sbr.rel (%p273) target = $region44
        $region43: #{tpu_custom_call.1} parent=39 // pred_region
          %s276 = sand.u32 %s32, 1
          %s277 = scalar_lea.sflag [#allocation4], %s276
          %s278 = sand.u32 %s32, 1
          %s279 = smul.addr %s278, 8
          %s280 = scalar_lea.vmem [#allocation3], %s279
          %s282 = ssub.s32 128, 128
          %283 = vsyncadd %s277, %s282
          %s284 = smul.addr %s22, 128
          %s285 = scalar_lea.hbm %s0, %s284
          %s287 = sshll.u32 %s280, 4
          %s288 = int_to_ptr.vmem [resolvable:$true] %s287
          %290 = dma.hbm_to_vmem [thread:$0]  %s285, 128, %s288, %s277
        $region44: #{tpu_custom_call.1} parent=39 // pred_fallthru
          _
        // Predicated region
        $region45: #{tpu_custom_call.1} parent=39 // pred_check
          %p291 = pneg %p68
        $region46: #{tpu_custom_call.1} parent=39 // pred_check_branch
          %293 = sbr.rel (%p291) target = $region48
        $region47: #{tpu_custom_call.1} parent=39 // pred_region
          %p294 = scmp.lt.s32.totalorder %s22, 1
          %s295 = scalar_select %p294, %s22, 1
          %s296 = scalar_lea.vmem %s1, %s295
        $region48: #{tpu_custom_call.1} parent=39 // pred_fallthru
          _
      $region40: #{tpu_custom_call.1} parent=5 // pred_fallthru
        _
      %p297 = scmp.le.s32.totalorder 1, %s22
      %p298 = scmp.lt.s32.totalorder %s22, 3
      %p299 = pnand %p297, %p298
      %p300 = pneg %p299
      // Predicated region
      $region49: #{tpu_custom_call.1} parent=5 // pred_check
        _
      $region50: #{tpu_custom_call.1} parent=5 // pred_check_branch
        %302 = sbr.rel (%p299) target = $region52
      $region51: #{tpu_custom_call.1} parent=5 // pred_region
        %s303 = ssub.s32 %s22, 1
        %s304 = sand.u32 %s35, 1
        %s305 = scalar_lea.sflag [#allocation4], %s304
        %s306 = sand.u32 %s35, 1
        %s307 = smul.addr %s306, 8
        %s308 = scalar_lea.vmem [#allocation3], %s307
        // Predicated region
        $region53: #{tpu_custom_call.1} parent=51 // pred_check
          %p309 = pneg %p48
        $region54: #{tpu_custom_call.1} parent=51 // pred_check_branch
          %311 = sbr.rel (%p309) target = $region56
        $region55: #{tpu_custom_call.1} parent=51 // pred_region
          %312 = dma.done %s305, 128
        $region56: #{tpu_custom_call.1} parent=51 // pred_fallthru
          _
        // Predicated region
        $region57: #{tpu_custom_call.1} parent=51 // pred_check
          %p313 = pneg %p95
        $region58: #{tpu_custom_call.1} parent=51 // pred_check_branch
          %315 = sbr.rel (%p313) target = $region60
        $region59: #{tpu_custom_call.1} parent=51 // pred_region
          %316 = dma.done [#allocation7], 256
        $region60: #{tpu_custom_call.1} parent=51 // pred_fallthru
          _
        %s317 = sand.u32 %s35, 1
        %s318 = scalar_lea.sflag [#allocation4], %s317
        %s319 = sand.u32 %s35, 1
        %s320 = smul.addr %s319, 8
        %s321 = scalar_lea.vmem [#allocation3], %s320
        %p322 = pneg %p48
        %p323 = pneg %p45
        %p324 = scmp.lt.s32.totalorder %s27, 1
        %s325 = scalar_select %p324, %s27, 1
        %s326 = scalar_lea.vmem %s1, %s325
        %p327 = pneg %p74
        %p328 = pneg %p71
        %p329 = pneg %p95
        %p330 = pneg %p92
        %p331 = pneg %p116
        %p332 = pneg %p113
        %p333 = pneg %p137
        %p334 = pneg %p134
        %p335 = pneg %p158
        %p336 = pneg %p155
        %p337 = pneg %p179
        %p338 = pneg %p176
        %p339 = pneg %p200
        %p340 = pneg %p197
        %p341 = pneg %p226
        %p342 = pneg %p223
        %s343 = sand.u32 %s213, 1
        %s344 = scalar_lea.sflag [#allocation5], %s343
        %s345 = sand.u32 %s213, 1
        %s346 = scalar_lea.vmem [#allocation8], %s345
        %p347 = scmp.lt.s32.totalorder %s27, 1
        %s348 = scalar_select %p347, %s27, 1
        %s349 = scalar_lea.vmem %s1, %s348
        %v351 = vld [vmem:[%s308] sm:$0xff]
        %v352 = vpack.c.bf16 %v351, %v351
        %v353 = vld [vmem:[#allocation6] sm:$0xf]
        %v354 = vld [vmem:[#allocation6 + $0x4] sm:$0xf]
        %v355 = vld [vmem:[#allocation6 + $0x8] sm:$0xf]
        %v356 = vld [vmem:[#allocation6 + $0xc] sm:$0xf]
        %v357 = vld [vmem:[%s3] sm:$0x1]
        %v359 = vlaneseq
        %v360 = vshrl.u32 %v359, 7
        %v361 = vsub.s32 0, %v360
        %v362 = vrot.slane %v357, %v361
        %v368 = vunpack.c.l.b16 %v353
        %v369 = vunpack.c.l.b16 %v354
        %v370 = vunpack.c.l.b16 %v355
        %v371 = vunpack.c.l.b16 %v356
        %v372 = vpack.c.b16 %v369, %v368
        %v373 = vpack.c.b16 %v371, %v370
        %vm376 = vcmask 261120
        %v378 = vsel %vm376, %v352, 0
        %380 = vmatprep.subr.bf16.mxu0 0
        %381 = vmatpush1.bf16.msra.mxu0 %v372
        %382 = vmatprep.subr.bf16.mxu0 0
        %383 = vmatpush1.bf16.msra.mxu0 %v373
        %384 = vmatprep.subr.bf16.mxu0 0
        %385 = vmatpush1.bf16.msra.mxu0 0
        %386 = vmatprep.subr.bf16.mxu0 0
        %387 = vmatpush1.bf16.msra.mxu0 0
        %388 = vmatprep.subr.bf16.mxu0 0
        %389 = vmatpush1.bf16.msra.mxu0 0
        %390 = vmatprep.subr.bf16.mxu0 0
        %391 = vmatpush1.bf16.msra.mxu0 0
        %392 = vmatprep.subr.bf16.mxu0 0
        %393 = vmatpush1.bf16.msra.mxu0 0
        %394 = vmatprep.subr.bf16.mxu0 0
        %395 = vmatpush1.bf16.msra.mxu0 0
        %396 = vmatprep.subr.bf16.mxu0 0
        %397 = vmatpush1.bf16.msra.mxu0 0
        %398 = vmatprep.subr.bf16.mxu0 0
        %399 = vmatpush1.bf16.msra.mxu0 0
        %400 = vmatprep.subr.bf16.mxu0 0
        %401 = vmatpush1.bf16.msra.mxu0 0
        %402 = vmatprep.subr.bf16.mxu0 0
        %403 = vmatpush1.bf16.msra.mxu0 0
        %404 = vmatprep.subr.bf16.mxu0 0
        %405 = vmatpush1.bf16.msra.mxu0 0
        %406 = vmatprep.subr.bf16.mxu0 0
        %407 = vmatpush1.bf16.msra.mxu0 0
        %408 = vmatprep.subr.bf16.mxu0 0
        %409 = vmatpush1.bf16.msra.mxu0 0
        %410 = vmatprep.subr.bf16.mxu0 0
        %411 = vmatpush1.bf16.msra.mxu0 0
        %412 = vmatprep.mubr.bf16.mxu0 0
        %413 = vmatmul.mubr.bf16.gmra.mrb[0].mxu0 %v378
        %v414 = vpop.f32.mrb[0].mxu0
        %v415 = vadd.f32 %v362, %v414
        %v416 = vpop.f32.mrb[0].mxu0
        %v417 = vpop.f32.mrb[0].mxu0
        %v418 = vpop.f32.mrb[0].mxu0
        %419 = vdwg.mxu0
        %v420 = vsel %vm376, %v415, 0.0
        %421 = vadd.xlane.f32.xlu0 %v420
        %v422 = vpop.xlane.xlu0 %421
        %v423 = vrcp.pop 32.0
        %v424 = vmul.f32 %v422, %v423
        %v425 = vmul.f32 %v415, %v415
        %v426 = vsel %vm376, %v425, 0.0
        %427 = vadd.xlane.f32.xlu0 %v426
        %v428 = vpop.xlane.xlu0 %427
        %v429 = vmul.f32 %v428, %v423
        %v430 = vmul.f32 %v424, %v424
        %v431 = vsub.f32 %v429, %v430
        %v432 = vsub.f32 %v415, %v424
        %v433 = vadd.f32 %v431, 1e-05
        %v434 = vrsqrt.pop %v433
        %v435 = vmul.f32 %v432, %v434
        %v436 = vld [vmem:[%s4] sm:$0x1]
        %v438 = vlaneseq
        %v439 = vshrl.u32 %v438, 7
        %v440 = vsub.s32 0, %v439
        %v441 = vrot.slane %v436, %v440
        %v443 = vmul.f32 %v435, %v441
        %v444 = vld [vmem:[%s5] sm:$0x1]
        %v446 = vlaneseq
        %v447 = vshrl.u32 %v446, 7
        %v448 = vsub.s32 0, %v447
        %v449 = vrot.slane %v444, %v448
        %v451 = vadd.f32 %v443, %v449
        %v452 = vmul.f32 %v451, 0.5
        %v453 = vmul.f32 %v451, 0.70710677
        %v454 = verf.f32.pop %v453
        %v455 = vadd.f32 %v454, 1.0
        %v456 = vmul.f32 %v452, %v455
        %v457 = vld [vmem:[%s6] sm:$0x1]
        %v459 = vlaneseq
        %v460 = vshrl.u32 %v459, 7
        %v461 = vsub.s32 0, %v460
        %v462 = vrot.slane %v457, %v461
        %v464 = vmul.f32 %v456, %v462
        %v465 = vsel %vm376, %v464, 0.0
        %466 = vadd.xlane.f32.xlu0 %v465
        %v467 = vpop.xlane.xlu0 %466
        %s468 = sld [smem:[#allocation2]]
        %v469 = vstv %s468
        %v470 = vadd.f32 %v467, %v469
        %v471 = vld [vmem:[%s349] sm:$0x1]
        %vm472 = vcmp.eq.f32.partialorder %v471, 0.0
        %v474 = vlaneseq
        %v475 = vshrl.u32 %v474, 7
        %v476 = vsub.s32 0, %v475
        %v477 = vrot.slane %v470, %v476
        %v478 = vlaneseq
        %v479 = vshrl.u32 %v478, 7
        %v480 = vsub.s32 1, %v479
        %v481 = vrot.slane %v470, %v480
        %v482 = vlaneseq
        %v483 = vshrl.u32 %v482, 7
        %v484 = vsub.s32 2, %v483
        %v485 = vrot.slane %v470, %v484
        %v486 = vlaneseq
        %v487 = vshrl.u32 %v486, 7
        %v488 = vsub.s32 3, %v487
        %v489 = vrot.slane %v470, %v488
        %v490 = vlaneseq
        %v491 = vshrl.u32 %v490, 7
        %v492 = vsub.s32 4, %v491
        %v493 = vrot.slane %v470, %v492
        %v494 = vlaneseq
        %v495 = vshrl.u32 %v494, 7
        %v496 = vsub.s32 5, %v495
        %v497 = vrot.slane %v470, %v496
        %v498 = vlaneseq
        %v499 = vshrl.u32 %v498, 7
        %v500 = vsub.s32 6, %v499
        %v501 = vrot.slane %v470, %v500
        %v502 = vlaneseq
        %v503 = vshrl.u32 %v502, 7
        %v504 = vsub.s32 7, %v503
        %v505 = vrot.slane %v470, %v504
        %v506 = vcombine.low %v477, %v481
        %v507 = vcombine.low %v485, %v489
        %v508 = vcombine.low %v493, %v497
        %v509 = vcombine.low %v501, %v505
        %v511 = vunpack.c.l.s4 1966171168
        %v512 = vunpack.c.0.s8 %v511
        %v513 = vlaneseq
        %v514 = vshrl.u32 %v513, 7
        %v515 = vsub.s32 %v512, %v514
        %v516 = vrot.slane %v506, %v515
        %v518 = vunpack.c.l.s4 1966171168
        %v519 = vunpack.c.0.s8 %v518
        %v520 = vlaneseq
        %v521 = vshrl.u32 %v520, 7
        %v522 = vsub.s32 %v519, %v521
        %v523 = vrot.slane %v507, %v522
        %v525 = vunpack.c.l.s4 1966171168
        %v526 = vunpack.c.0.s8 %v525
        %v527 = vlaneseq
        %v528 = vshrl.u32 %v527, 7
        %v529 = vsub.s32 %v526, %v528
        %v530 = vrot.slane %v508, %v529
        %v532 = vunpack.c.l.s4 1966171168
        %v533 = vunpack.c.0.s8 %v532
        %v534 = vlaneseq
        %v535 = vshrl.u32 %v534, 7
        %v536 = vsub.s32 %v533, %v535
        %v537 = vrot.slane %v509, %v536
        %v538 = vcombine.low %v516, %v523
        %v539 = vcombine.low %v530, %v537
        %v541 = vunpack.c.l.s4 1966171168
        %v542 = vunpack.c.0.s8 %v541
        %v543 = vlaneseq
        %v544 = vshrl.u32 %v543, 7
        %v545 = vsub.s32 %v542, %v544
        %v546 = vrot.slane %v538, %v545
        %v548 = vunpack.c.l.s4 1966171168
        %v549 = vunpack.c.0.s8 %v548
        %v550 = vlaneseq
        %v551 = vshrl.u32 %v550, 7
        %v552 = vsub.s32 %v549, %v551
        %v553 = vrot.slane %v539, %v552
        %v554 = vcombine.low %v546, %v553
        %555 = vset.pattern.permute.xlu0 0
        %556 = vperm.xlu0 %555, %v554
        %v557 = vpop.permute.xlu0 %556
        %v558 = vlaneseq
        %v559 = vand.u32 %v558, 127
        %v560 = vlaneseq
        %v561 = vshrl.u32 %v560, 7
        %v562 = vsub.s32 %v559, %v561
        %v563 = vrot.slane %v557, %v562
        %v565 = vunpack.c.l.s4 1966171168
        %v566 = vunpack.c.0.s8 %v565
        %v567 = vlaneseq
        %v568 = vshrl.u32 %v567, 7
        %v569 = vsub.s32 %v566, %v568
        %v570 = vrot.slane %v563, %v569
        %v572 = vunpack.c.l.s4 1966171168
        %v573 = vunpack.c.0.s8 %v572
        %v574 = vlaneseq
        %v575 = vshrl.u32 %v574, 7
        %v576 = vsub.s32 %v573, %v575
        %v577 = vrot.slane %v570, %v576
        %v579 = vsel %vm472, -inf, %v577
        %vm580 = vcmask 57344
        %v581 = vsel %vm580, %v579, -inf
        %582 = vmax.xlane.f32.xlu0 %v581
        %v583 = vpop.xlane.xlu0 %582
        %v584 = vsub.f32 %v579, %v583
        %v585 = vmul.f32 %v584, 1.442695
        %v586 = vpow.pop %v585
        %v587 = vsel %vm580, %v586, 0.0
        %588 = vadd.xlane.f32.xlu0 %v587
        %v589 = vpop.xlane.xlu0 %588
        %v590 = vrcp.pop %v589
        %v591 = vmul.f32 %v586, %v590
        %v592 = vlaneseq
        %v593 = vshrl.u32 %v592, 7
        %v594 = vsub.s32 0, %v593
        %v595 = vrot.slane %v591, %v594
        %597 = vbcast.lane.b32.xlu0 %v595, 256
        %v598 = vpop.permute.xlu0 %597
        %v599 = vmul.f32 %v598, %v351
        %v600 = vsel %vm376, %v599, 0.0
        %v601 = vrot.slane %v600, 4
        %v602 = vadd.f32 %v600, %v601
        %v603 = vrot.slane %v602, 2
        %v604 = vadd.f32 %v602, %v603
        %v605 = vrot.slane %v604, 1
        %v606 = vadd.f32 %v604, %v605
        %vm607 = vcmask 253952
        %608 = vst.msk [vmem:[%s346] sm:$0x1] %vm607, %v606
        %s609 = sand.u32 %s213, 1
        %s610 = scalar_lea.sflag [#allocation5], %s609
        %s611 = sand.u32 %s213, 1
        %s612 = scalar_lea.vmem [#allocation8], %s611
        // Predicated region
        $region61: #{tpu_custom_call.1} parent=51 // pred_check
          %p613 = pneg %p223
        $region62: #{tpu_custom_call.1} parent=51 // pred_check_branch
          %615 = sbr.rel (%p613) target = $region64
        $region63: #{tpu_custom_call.1} parent=51 // pred_region
          %s617 = ssub.s32 16, 16
          %618 = vsyncadd %s610, %s617
          %s619 = smul.addr %s27, 16
          %s620 = scalar_lea.hbm %s8, %s619
          %s622 = sshll.u32 %s612, 4
          %s623 = int_to_ptr.vmem [resolvable:$true] %s622
          %625 = dma.vmem_to_hbm [thread:$0]  %s623, 16, %s620, %s610
        $region64: #{tpu_custom_call.1} parent=51 // pred_fallthru
          _
      $region52: #{tpu_custom_call.1} parent=5 // pred_fallthru
        _
      %p626 = scmp.le.s32.totalorder 2, %s22
      // Predicated region
      $region65: #{tpu_custom_call.1} parent=5 // pred_check
        %p627 = pneg %p626
      $region66: #{tpu_custom_call.1} parent=5 // pred_check_branch
        %629 = sbr.rel (%p627) target = $region68
      $region67: #{tpu_custom_call.1} parent=5 // pred_region
        %s630 = ssub.s32 %s22, 2
        // Predicated region
        $region69: #{tpu_custom_call.1} parent=67 // pred_check
          %p631 = pneg %p229
        $region70: #{tpu_custom_call.1} parent=67 // pred_check_branch
          %633 = sbr.rel (%p631) target = $region72
        $region71: #{tpu_custom_call.1} parent=67 // pred_region
          %s634 = sand.u32 %s214, 1
          %s635 = scalar_lea.sflag [#allocation5], %s634
          %s636 = sand.u32 %s214, 1
          %s637 = scalar_lea.vmem [#allocation8], %s636
          %638 = dma.done %s635, 16
        $region72: #{tpu_custom_call.1} parent=67 // pred_fallthru
          _
      $region68: #{tpu_custom_call.1} parent=5 // pred_fallthru
        _
    $region6: #{tpu_custom_call.1} parent=1 // loop_footer
      %s26 = sadd.s32 1, %s22
    $region7: #{tpu_custom_call.1} parent=1 // loop_footer_branch
      %21 = sbr.rel target = $region3
    $region8: #{tpu_custom_call.1} parent=1 // loop_exit
      _
    %639 = vsyncpa [#allocation4], 1
    %s640 = scalar_lea.sflag [#allocation4], 1
    %641 = vsyncpa %s640, 1
    %642 = vsyncpa [#allocation7], 1
    %643 = vsyncpa [#allocation5], 1
    %s644 = scalar_lea.sflag [#allocation5], 1
    %645 = vsyncpa %s644, 1

</llo_original>
